<compile_context>
chip_gen: v7x
topology: tpu7x:2x2x1
jax: 0.10.0
libtpu: 0.0.40
codegen_flags: <defaults>
</compile_context>

<pallas_src>
import jax
import jax.numpy as jnp
from jax.experimental import pallas as pl
from jax.experimental.pallas import tpu as pltpu

HIDDEN = 4
TARGET_TILE_BYTES = 4 * 1024 * 1024     # ~4 MiB x tile (2-8 MiB sweet spot)
VMEM_BUDGET_BYTES = 48 * 1024 * 1024    # v7x-safe total footprint cap


def _round_up(x, m):
    return ((x + m - 1) // m) * m


def mlp_kernel(x_ref, w1_ref, b1_ref, w2_ref, b2_ref, o_ref):
    # x_ref: (TB, D)  w1_ref: (D, 4)  b1_ref: (1, 4)  w2_ref: (1, 4)
    # b2_ref: (1, 1)  o_ref: (1, 1, TB)
    x = x_ref[...]                                                   # (TB, D)

    # Layer 1 on the MXU: (TB, D) @ (D, 4), f32 accumulate.
    h = jnp.dot(x, w1_ref[...], preferred_element_type=jnp.float32)  # (TB, 4)
    h = jnp.maximum(h + b1_ref[...], 0.0)

    # Layer 2: contract hidden dim of (1,4) against last dim of (TB,4),
    # producing (1, TB). The batch dim lands on lanes so the output store
    # (and HBM writeback) is lane-dense and contiguous.
    y = jax.lax.dot_general(
        w2_ref[...], h,
        dimension_numbers=(((1,), (1,)), ((), ())),
        preferred_element_type=jnp.float32)                          # (1, TB)
    y = y + b2_ref[...]                                              # (1,1) bcast

    o_ref[...] = y[None].astype(o_ref.dtype)                         # (1, 1, TB)


def _pick_batch_tile(B, D, itemsize):
    """Rows per tile: bytes-targeted, multiple of 128, VMEM- and TC-aware."""
    bytes_per_row = max(D * itemsize, 1)

    # ~4 MiB of x per tile, rounded up to a multiple of 128 rows.
    tb = _round_up(max(TARGET_TILE_BYTES // bytes_per_row, 1), 128)

    # Keep the double-buffered x tiles (plus resident weights / out buffers)
    # inside the v7x-safe VMEM budget.
    w1_pad_bytes = 2 * _round_up(D, 8) * 128 * itemsize              # padded w1 x2
    avail = max(VMEM_BUDGET_BYTES - w1_pad_bytes - (1 << 20), bytes_per_row)
    max_rows = max((avail // (2 * bytes_per_row)) // 128 * 128, 128)
    tb = min(tb, max_rows)

    # Don't exceed the (rounded-up) batch.
    tb = min(tb, _round_up(max(B, 1), 128))

    # v7x: guarantee >= 2 grid steps when the batch allows, so
    # dimension_semantics=("parallel",) shards across both TensorCores.
    if B > 128 and pl.cdiv(B, tb) < 2:
        tb = _round_up(pl.cdiv(B, 2), 128)

    return max(tb, 128)


def mlp_forward(x, w1, b1, w2, b2):
    """Returns (B,) f32 == (relu(x @ w1 + b1) @ w2.T + b2).squeeze(1)."""
    B, D = x.shape
    itemsize = x.dtype.itemsize
    tb = _pick_batch_tile(B, D, itemsize)
    G = pl.cdiv(B, tb)  # partial last block is fine: rows are independent,
                        # and the garbage tail of the output is sliced off.

    # Explicit VMEM limit: 2x x tile + 2x padded w1 + small bias/out buffers.
    x_tile_bytes = tb * D * itemsize
    w1_pad_bytes = 2 * _round_up(D, 8) * 128 * itemsize
    vmem_limit = int(min(max(2 * x_tile_bytes + w1_pad_bytes + (2 << 20),
                             16 << 20),
                         VMEM_BUDGET_BYTES))

    # Memory-bound cost hint for XLA's scheduler.
    flops = 2 * B * D * HIDDEN + 4 * B * HIDDEN
    bytes_accessed = (B * D + B + D * HIDDEN + 2 * HIDDEN + 1) * itemsize

    out = pl.pallas_call(
        mlp_kernel,
        grid=(G,),
        in_specs=[
            pl.BlockSpec((tb, D), lambda i: (i, 0)),        # x: pipelined tiles
            pl.BlockSpec((D, HIDDEN), lambda i: (0, 0)),    # w1: VMEM-resident
            pl.BlockSpec((1, HIDDEN), lambda i: (0, 0)),    # b1
            pl.BlockSpec((1, HIDDEN), lambda i: (0, 0)),    # w2 (row)
            pl.BlockSpec((1, 1), lambda i: (0, 0)),         # b2
        ],
        out_specs=pl.BlockSpec((1, 1, tb), lambda i: (i, 0, 0)),
        out_shape=jax.ShapeDtypeStruct((G, 1, tb), jnp.float32),
        compiler_params=pltpu.CompilerParams(
            dimension_semantics=("parallel",),
            vmem_limit_bytes=vmem_limit,
        ),
        cost_estimate=pl.CostEstimate(
            flops=flops, transcendentals=0, bytes_accessed=bytes_accessed),
    )(x, w1, b1, w2, b2)

    # (G, 1, tb) -> (G*tb,) -> drop overhang. Matches torch's squeeze(1).
    return out.reshape(-1)[:B]


def init_params(key, input_dim):
    # Deterministic init mimicking nn.Linear (uniform +/- 1/sqrt(fan_in)).
    k1, k2, k3, k4 = jax.random.split(key, 4)
    bound1 = 1.0 / jnp.sqrt(float(input_dim))
    bound2 = 1.0 / jnp.sqrt(float(HIDDEN))
    w1 = jax.random.uniform(k1, (input_dim, HIDDEN), jnp.float32, -bound1, bound1)
    b1 = jax.random.uniform(k2, (1, HIDDEN), jnp.float32, -bound1, bound1)
    w2 = jax.random.uniform(k3, (1, HIDDEN), jnp.float32, -bound2, bound2)
    b2 = jax.random.uniform(k4, (1, 1), jnp.float32, -bound2, bound2)
    return w1, b1, w2, b2


def _reference(x, w1, b1, w2, b2):
    return (jnp.maximum(x @ w1 + b1, 0.0) @ w2.T + b2)[:, 0]


if __name__ == "__main__":
    key = jax.random.PRNGKey(0)
    kx, kp, kx2 = jax.random.split(key, 3)

    input_dim = 32
    w1, b1, w2, b2 = init_params(kp, input_dim)

    # Small case (single partial block).
    batch = 8
    x = jax.random.normal(kx, (batch, input_dim), jnp.float32)
    y = mlp_forward(x, w1, b1, w2, b2)
    jax.block_until_ready(y)
    assert y.shape == (batch,)
    assert jnp.allclose(y, _reference(x, w1, b1, w2, b2), atol=1e-5), \
        "mismatch vs reference (small batch)"

    # Multi-tile case with a partial last block (exercises grid + tail slice).
    batch2 = 300
    x2 = jax.random.normal(kx2, (batch2, input_dim), jnp.float32)
    y2 = mlp_forward(x2, w1, b1, w2, b2)
    jax.block_until_ready(y2)
    assert y2.shape == (batch2,)
    assert jnp.allclose(y2, _reference(x2, w1, b1, w2, b2), atol=1e-5), \
        "mismatch vs reference (multi-tile batch)"

    print("KERNEL_OK")
</pallas_src>

<mosaic_0001>
module attributes {stable_mosaic.version = 11 : i64} {
  func.func @mlp_kernel(%arg0: i32, %arg1: memref<128x32xf32, #tpu.memory_space<vmem>>, %arg2: memref<32x4xf32, #tpu.memory_space<vmem>>, %arg3: memref<1x4xf32, #tpu.memory_space<vmem>>, %arg4: memref<1x4xf32, #tpu.memory_space<vmem>>, %arg5: memref<1x1xf32, #tpu.memory_space<vmem>>, %arg6: memref<1x1x128xf32, #tpu.memory_space<vmem>>) attributes {dimension_semantics = [#tpu.dimension_semantics<parallel>], iteration_bounds = array<i64: 1>, scalar_prefetch = 0 : i64, scratch_operands = 0 : i64, tpu.core_type = #tpu.core_type<tc>, window_params = [{transform_indices = @transform_0, window_bounds = array<i64: 128, 32>}, {pipeline_mode = #tpu.pipeline_mode<synchronous>, transform_indices = @transform_1, window_bounds = array<i64: 32, 4>}, {pipeline_mode = #tpu.pipeline_mode<synchronous>, transform_indices = @transform_2, window_bounds = array<i64: 1, 4>}, {pipeline_mode = #tpu.pipeline_mode<synchronous>, transform_indices = @transform_3, window_bounds = array<i64: 1, 4>}, {pipeline_mode = #tpu.pipeline_mode<synchronous>, transform_indices = @transform_4, window_bounds = array<i64: 1, 1>}, {transform_indices = @transform_5, window_bounds = array<i64: 1, 1, 128>}]} {
    %c0 = arith.constant 0 : index
    %c0_0 = arith.constant 0 : index
    %0 = vector.load %arg1[%c0, %c0_0] : memref<128x32xf32, #tpu.memory_space<vmem>>, vector<128x32xf32>
    %c0_1 = arith.constant 0 : index
    %c0_2 = arith.constant 0 : index
    %1 = vector.load %arg2[%c0_1, %c0_2] : memref<32x4xf32, #tpu.memory_space<vmem>>, vector<32x4xf32>
    %cst = arith.constant dense<0.000000e+00> : vector<128x4xf32>
    %2 = tpu.matmul %0, %1, %cst {dimension_numbers = #tpu.dot_dimension_numbers<[1], [0], [0], [1], [0, 0, 1, 1], [], []>} : vector<128x32xf32>, vector<32x4xf32>, vector<128x4xf32> -> vector<128x4xf32>
    %c0_3 = arith.constant 0 : index
    %c0_4 = arith.constant 0 : index
    %3 = vector.load %arg3[%c0_3, %c0_4] : memref<1x4xf32, #tpu.memory_space<vmem>>, vector<1x4xf32>
    %4 = vector.broadcast %3 : vector<1x4xf32> to vector<128x4xf32>
    %5 = arith.addf %2, %4 : vector<128x4xf32>
    %cst_5 = arith.constant 0.000000e+00 : f32
    %6 = vector.broadcast %cst_5 : f32 to vector<128x4xf32>
    %7 = arith.maximumf %5, %6 : vector<128x4xf32>
    %c0_6 = arith.constant 0 : index
    %c0_7 = arith.constant 0 : index
    %8 = vector.load %arg4[%c0_6, %c0_7] : memref<1x4xf32, #tpu.memory_space<vmem>>, vector<1x4xf32>
    %cst_8 = arith.constant dense<0.000000e+00> : vector<1x128xf32>
    %9 = tpu.matmul %8, %7, %cst_8 {dimension_numbers = #tpu.dot_dimension_numbers<[1], [1], [0], [0], [0, 0, 1, 0], [], []>} : vector<1x4xf32>, vector<128x4xf32>, vector<1x128xf32> -> vector<1x128xf32>
    %c0_9 = arith.constant 0 : index
    %c0_10 = arith.constant 0 : index
    %10 = vector.load %arg5[%c0_9, %c0_10] : memref<1x1xf32, #tpu.memory_space<vmem>>, vector<1x1xf32>
    %11 = vector.broadcast %10 : vector<1x1xf32> to vector<1x128xf32>
    %12 = arith.addf %9, %11 : vector<1x128xf32>
    %13 = vector.shape_cast %12 : vector<1x128xf32> to vector<1x1x128xf32>
    %c0_11 = arith.constant 0 : index
    %c0_12 = arith.constant 0 : index
    %c0_13 = arith.constant 0 : index
    %14 = vector.load %arg6[%c0_11, %c0_12, %c0_13] : memref<1x1x128xf32, #tpu.memory_space<vmem>>, vector<1x1x128xf32>
    tpu.vector_store %arg6[%c0_11, %c0_12, %c0_13], %13 {strides = array<i32>} : memref<1x1x128xf32, #tpu.memory_space<vmem>>, vector<1x1x128xf32>,
    return
  }
  func.func @transform_0(%arg0: i32) -> (i32, i32) {
    %c0_i32 = arith.constant 0 : i32
    %c0_i32_0 = arith.constant 0 : i32
    return %arg0, %c0_i32 : i32, i32
  }
  func.func @transform_1(%arg0: i32) -> (i32, i32) {
    %c0_i32 = arith.constant 0 : i32
    %c0_i32_0 = arith.constant 0 : i32
    %c0_i32_1 = arith.constant 0 : i32
    return %c0_i32, %c0_i32_0 : i32, i32
  }
  func.func @transform_2(%arg0: i32) -> (i32, i32) {
    %c0_i32 = arith.constant 0 : i32
    %c0_i32_0 = arith.constant 0 : i32
    %c0_i32_1 = arith.constant 0 : i32
    return %c0_i32, %c0_i32_0 : i32, i32
  }
  func.func @transform_3(%arg0: i32) -> (i32, i32) {
    %c0_i32 = arith.constant 0 : i32
    %c0_i32_0 = arith.constant 0 : i32
    %c0_i32_1 = arith.constant 0 : i32
    return %c0_i32, %c0_i32_0 : i32, i32
  }
  func.func @transform_4(%arg0: i32) -> (i32, i32) {
    %c0_i32 = arith.constant 0 : i32
    %c0_i32_0 = arith.constant 0 : i32
    %c0_i32_1 = arith.constant 0 : i32
    return %c0_i32, %c0_i32_0 : i32, i32
  }
  func.func @transform_5(%arg0: i32) -> (i32, i32, i32) {
    %c0_i32 = arith.constant 0 : i32
    %c0_i32_0 = arith.constant 0 : i32
    %c0_i32_1 = arith.constant 0 : i32
    return %arg0, %c0_i32, %c0_i32_0 : i32, i32, i32
  }
}

</mosaic_0001>

<llo_original>
// kernel: tpu_custom_call.1
$region0: #{tpu_custom_call.1}
  #allocation0 [shape = 'u32[]', space=smem, size = 0x4, offset = 0x4, fixed_abs, tag = 'smem constant byte address 0x4 - core index']
  #allocation1 [shape = 'u32[144,128]{1,0:T(1,128)}', space=vmem, size = 0x12000, scoped, tag = 'internal scratch']
  #allocation2 [shape = 'f32[1,1]{1,0:T(1,128)S(1)}', space=vmem, size = 0x200, scoped, tag = 'scoped memory for tpu_custom_call.1']
  %s0 = inlined_call_operand.vmem [shape: f32[8,32], index: 0, kind: input, shape index: {}]
  %s1 = inlined_call_operand.vmem [shape: f32[32,4], index: 1, kind: input, shape index: {}]
  %s2 = inlined_call_operand.vmem [shape: f32[1,4], index: 2, kind: input, shape index: {}]
  %s3 = inlined_call_operand.vmem [shape: f32[1,4], index: 3, kind: input, shape index: {}]
  %s4 = inlined_call_operand.<no memory space> [shape: f32[1,1], index: 4, kind: input, shape index: {}]
  %s5 = inlined_call_operand.hbm [shape: f32[1,1,128], index: 5, kind: output, shape index: {}]
  %s6 = sld [smem:[#allocation0]]
  $region30: #{tpu_custom_call.1} parent=0
    _
  %s8 = ssub.s32 1, %s6
  %s9 = scalar_select 0, %s8, %s6
  %v10 = vstv %s4
  %11 = vst [vmem:[#allocation2] sm:$0x1] %v10
  $region1: #{tpu_custom_call.1} parent=0
    #allocation3 [shape = 'u8[512]{0}', space=vmem, size = 0x400, scoped, tag = 'output window, operand 0, single buffered']
    #allocation4 [shape = 's32[1]{0}', space=sflag, size = 0x4, scoped, tag = 'scoped memory for tpu_custom_call.1']
    %12 = vsyncpa [#allocation4], 0
    // Predicated region
    $region2: #{tpu_custom_call.1} parent=1 // pred_check
      _
    $region3: #{tpu_custom_call.1} parent=1 // pred_check_branch
      %14 = sbr.rel (0) target = $region5
    $region4: #{tpu_custom_call.1} parent=1 // pred_region
      _
    $region5: #{tpu_custom_call.1} parent=1 // pred_fallthru
      _
    // Predicated region
    $region6: #{tpu_custom_call.1} parent=1 // pred_check
      _
    $region7: #{tpu_custom_call.1} parent=1 // pred_check_branch
      %16 = sbr.rel (0) target = $region9
    $region8: #{tpu_custom_call.1} parent=1 // pred_region
      _
    $region9: #{tpu_custom_call.1} parent=1 // pred_fallthru
      _
    // Predicated region
    $region10: #{tpu_custom_call.1} parent=1 // pred_check
      _
    $region11: #{tpu_custom_call.1} parent=1 // pred_check_branch
      %18 = sbr.rel (0) target = $region13
    $region12: #{tpu_custom_call.1} parent=1 // pred_region
      _
    $region13: #{tpu_custom_call.1} parent=1 // pred_fallthru
      _
    // Predicated region
    $region14: #{tpu_custom_call.1} parent=1 // pred_check
      _
    $region15: #{tpu_custom_call.1} parent=1 // pred_check_branch
      %20 = sbr.rel (0) target = $region17
    $region16: #{tpu_custom_call.1} parent=1 // pred_region
      _
    $region17: #{tpu_custom_call.1} parent=1 // pred_fallthru
      _
    // Predicated region
    $region18: #{tpu_custom_call.1} parent=1 // pred_check
      _
    $region19: #{tpu_custom_call.1} parent=1 // pred_check_branch
      %22 = sbr.rel (0) target = $region21
    $region20: #{tpu_custom_call.1} parent=1 // pred_region
      _
    $region21: #{tpu_custom_call.1} parent=1 // pred_fallthru
      _
    %v23 = vld [vmem:[%s0] sm:$0xff]
    %v24 = vld [vmem:[%s0 + $0x8] sm:$0xff]
    %v25 = vld [vmem:[%s0 + $0x10] sm:$0xff]
    %v26 = vld [vmem:[%s0 + $0x18] sm:$0xff]
    %v27 = vld [vmem:[%s0 + $0x20] sm:$0xff]
    %v28 = vld [vmem:[%s0 + $0x28] sm:$0xff]
    %v29 = vld [vmem:[%s0 + $0x30] sm:$0xff]
    %v30 = vld [vmem:[%s0 + $0x38] sm:$0xff]
    %v31 = vld [vmem:[%s0 + $0x40] sm:$0xff]
    %v32 = vld [vmem:[%s0 + $0x48] sm:$0xff]
    %v33 = vld [vmem:[%s0 + $0x50] sm:$0xff]
    %v34 = vld [vmem:[%s0 + $0x58] sm:$0xff]
    %v35 = vld [vmem:[%s0 + $0x60] sm:$0xff]
    %v36 = vld [vmem:[%s0 + $0x68] sm:$0xff]
    %v37 = vld [vmem:[%s0 + $0x70] sm:$0xff]
    %v38 = vld [vmem:[%s0 + $0x78] sm:$0xff]
    %v39 = vld [vmem:[%s1] sm:$0xff]
    %v40 = vld [vmem:[%s1 + $0x8] sm:$0xff]
    %v41 = vld [vmem:[%s1 + $0x10] sm:$0xff]
    %v42 = vld [vmem:[%s1 + $0x18] sm:$0xff]
    %v43 = vld [vmem:[%s2] sm:$0x1]
    %v45 = vlaneseq
    %v46 = vshrl.u32 %v45, 7
    %v47 = vsub.s32 0, %v46
    %v48 = vrot.slane %v43, %v47
    %vm50 = vcmask 261120
    %v52 = vsel %vm50, %v23, 0
    %v55 = vsel %vm50, %v24, 0
    %v58 = vsel %vm50, %v25, 0
    %v61 = vsel %vm50, %v26, 0
    %v64 = vsel %vm50, %v27, 0
    %v67 = vsel %vm50, %v28, 0
    %v70 = vsel %vm50, %v29, 0
    %v73 = vsel %vm50, %v30, 0
    %v76 = vsel %vm50, %v31, 0
    %v79 = vsel %vm50, %v32, 0
    %v82 = vsel %vm50, %v33, 0
    %v85 = vsel %vm50, %v34, 0
    %v88 = vsel %vm50, %v35, 0
    %v91 = vsel %vm50, %v36, 0
    %v94 = vsel %vm50, %v37, 0
    %v97 = vsel %vm50, %v38, 0
    %99 = vmatprep.subr.mxu0 0.0
    %100 = vmatpush1.msra.mxu0 %v39
    %101 = vmatprep.subr.mxu0 0.0
    %102 = vmatpush1.msra.mxu0 %v40
    %103 = vmatprep.subr.mxu0 0.0
    %104 = vmatpush1.msra.mxu0 %v41
    %105 = vmatprep.subr.mxu0 0.0
    %106 = vmatpush1.msra.mxu0 %v42
    %107 = vmatprep.subr.mxu0 0.0
    %108 = vmatpush1.msra.mxu0 0.0
    %109 = vmatprep.subr.mxu0 0.0
    %110 = vmatpush1.msra.mxu0 0.0
    %111 = vmatprep.subr.mxu0 0.0
    %112 = vmatpush1.msra.mxu0 0.0
    %113 = vmatprep.subr.mxu0 0.0
    %114 = vmatpush1.msra.mxu0 0.0
    %115 = vmatprep.subr.mxu0 0.0
    %116 = vmatpush1.msra.mxu0 0.0
    %117 = vmatprep.subr.mxu0 0.0
    %118 = vmatpush1.msra.mxu0 0.0
    %119 = vmatprep.subr.mxu0 0.0
    %120 = vmatpush1.msra.mxu0 0.0
    %121 = vmatprep.subr.mxu0 0.0
    %122 = vmatpush1.msra.mxu0 0.0
    %123 = vmatprep.subr.mxu0 0.0
    %124 = vmatpush1.msra.mxu0 0.0
    %125 = vmatprep.subr.mxu0 0.0
    %126 = vmatpush1.msra.mxu0 0.0
    %127 = vmatprep.subr.mxu0 0.0
    %128 = vmatpush1.msra.mxu0 0.0
    %129 = vmatprep.subr.mxu0 0.0
    %130 = vmatpush1.msra.mxu0 0.0
    %131 = vmatprep.subr.mxu0 0.0
    %132 = vmatpush1.msra.mxu0 0.0
    %133 = vmatprep.subr.mxu0 0.0
    %134 = vmatpush1.msra.mxu0 0.0
    %135 = vmatprep.subr.mxu0 0.0
    %136 = vmatpush1.msra.mxu0 0.0
    %137 = vmatprep.subr.mxu0 0.0
    %138 = vmatpush1.msra.mxu0 0.0
    %139 = vmatprep.subr.mxu0 0.0
    %140 = vmatpush1.msra.mxu0 0.0
    %141 = vmatprep.subr.mxu0 0.0
    %142 = vmatpush1.msra.mxu0 0.0
    %143 = vmatprep.subr.mxu0 0.0
    %144 = vmatpush1.msra.mxu0 0.0
    %145 = vmatprep.subr.mxu0 0.0
    %146 = vmatpush1.msra.mxu0 0.0
    %147 = vmatprep.subr.mxu0 0.0
    %148 = vmatpush1.msra.mxu0 0.0
    %149 = vmatprep.subr.mxu0 0.0
    %150 = vmatpush1.msra.mxu0 0.0
    %151 = vmatprep.subr.mxu0 0.0
    %152 = vmatpush1.msra.mxu0 0.0
    %153 = vmatprep.subr.mxu0 0.0
    %154 = vmatpush1.msra.mxu0 0.0
    %155 = vmatprep.subr.mxu0 0.0
    %156 = vmatpush1.msra.mxu0 0.0
    %157 = vmatprep.subr.mxu0 0.0
    %158 = vmatpush1.msra.mxu0 0.0
    %159 = vmatprep.subr.mxu0 0.0
    %160 = vmatpush1.msra.mxu0 0.0
    %161 = vmatprep.subr.mxu0 0.0
    %162 = vmatpush1.msra.mxu0 0.0
    %163 = vmatprep.mubr.f32.mxu0 0.0
    %164 = vmatmul.mubr.f32.gmra.mrb[0].mxu0 %v52
    %v165 = vpop.f32.mrb[0].mxu0
    %v166 = vadd.f32 %v48, %v165
    %v167 = vpop.f32.mrb[0].mxu0
    %168 = vmatprep.mubr.f32.mxu0 0.0
    %169 = vmatmul.mubr.f32.gmra.mrb[0].mxu0 %v55
    %v170 = vpop.f32.mrb[0].mxu0
    %v171 = vadd.f32 %v48, %v170
    %v172 = vpop.f32.mrb[0].mxu0
    %173 = vmatprep.mubr.f32.mxu0 0.0
    %174 = vmatmul.mubr.f32.gmra.mrb[0].mxu0 %v58
    %v175 = vpop.f32.mrb[0].mxu0
    %v176 = vadd.f32 %v48, %v175
    %v177 = vpop.f32.mrb[0].mxu0
    %178 = vmatprep.mubr.f32.mxu0 0.0
    %179 = vmatmul.mubr.f32.gmra.mrb[0].mxu0 %v61
    %v180 = vpop.f32.mrb[0].mxu0
    %v181 = vadd.f32 %v48, %v180
    %v182 = vpop.f32.mrb[0].mxu0
    %183 = vmatprep.mubr.f32.mxu0 0.0
    %184 = vmatmul.mubr.f32.gmra.mrb[0].mxu0 %v64
    %v185 = vpop.f32.mrb[0].mxu0
    %v186 = vadd.f32 %v48, %v185
    %v187 = vpop.f32.mrb[0].mxu0
    %188 = vmatprep.mubr.f32.mxu0 0.0
    %189 = vmatmul.mubr.f32.gmra.mrb[0].mxu0 %v67
    %v190 = vpop.f32.mrb[0].mxu0
    %v191 = vadd.f32 %v48, %v190
    %v192 = vpop.f32.mrb[0].mxu0
    %193 = vmatprep.mubr.f32.mxu0 0.0
    %194 = vmatmul.mubr.f32.gmra.mrb[0].mxu0 %v70
    %v195 = vpop.f32.mrb[0].mxu0
    %v196 = vadd.f32 %v48, %v195
    %v197 = vpop.f32.mrb[0].mxu0
    %198 = vmatprep.mubr.f32.mxu0 0.0
    %199 = vmatmul.mubr.f32.gmra.mrb[0].mxu0 %v73
    %v200 = vpop.f32.mrb[0].mxu0
    %v201 = vadd.f32 %v48, %v200
    %v202 = vpop.f32.mrb[0].mxu0
    %203 = vmatprep.mubr.f32.mxu0 0.0
    %204 = vmatmul.mubr.f32.gmra.mrb[0].mxu0 %v76
    %v205 = vpop.f32.mrb[0].mxu0
    %v206 = vadd.f32 %v48, %v205
    %v207 = vpop.f32.mrb[0].mxu0
    %208 = vmatprep.mubr.f32.mxu0 0.0
    %209 = vmatmul.mubr.f32.gmra.mrb[0].mxu0 %v79
    %v210 = vpop.f32.mrb[0].mxu0
    %v211 = vadd.f32 %v48, %v210
    %v212 = vpop.f32.mrb[0].mxu0
    %213 = vmatprep.mubr.f32.mxu0 0.0
    %214 = vmatmul.mubr.f32.gmra.mrb[0].mxu0 %v82
    %v215 = vpop.f32.mrb[0].mxu0
    %v216 = vadd.f32 %v48, %v215
    %v217 = vpop.f32.mrb[0].mxu0
    %218 = vmatprep.mubr.f32.mxu0 0.0
    %219 = vmatmul.mubr.f32.gmra.mrb[0].mxu0 %v85
    %v220 = vpop.f32.mrb[0].mxu0
    %v221 = vadd.f32 %v48, %v220
    %v222 = vpop.f32.mrb[0].mxu0
    %223 = vmatprep.mubr.f32.mxu0 0.0
    %224 = vmatmul.mubr.f32.gmra.mrb[0].mxu0 %v88
    %v225 = vpop.f32.mrb[0].mxu0
    %v226 = vadd.f32 %v48, %v225
    %v227 = vpop.f32.mrb[0].mxu0
    %228 = vmatprep.mubr.f32.mxu0 0.0
    %229 = vmatmul.mubr.f32.gmra.mrb[0].mxu0 %v91
    %v230 = vpop.f32.mrb[0].mxu0
    %v231 = vadd.f32 %v48, %v230
    %v232 = vpop.f32.mrb[0].mxu0
    %233 = vmatprep.mubr.f32.mxu0 0.0
    %234 = vmatmul.mubr.f32.gmra.mrb[0].mxu0 %v94
    %v235 = vpop.f32.mrb[0].mxu0
    %v236 = vadd.f32 %v48, %v235
    %v237 = vpop.f32.mrb[0].mxu0
    %238 = vmatprep.mubr.f32.mxu0 0.0
    %239 = vmatmul.mubr.f32.gmra.mrb[0].mxu0 %v97
    %v240 = vpop.f32.mrb[0].mxu0
    %v241 = vadd.f32 %v48, %v240
    %v242 = vpop.f32.mrb[0].mxu0
    %243 = vdwg.mxu0
    %v244 = vmax.f32 %v166, 0.0
    %v245 = vmax.f32 %v171, 0.0
    %v246 = vmax.f32 %v176, 0.0
    %v247 = vmax.f32 %v181, 0.0
    %v248 = vmax.f32 %v186, 0.0
    %v249 = vmax.f32 %v191, 0.0
    %v250 = vmax.f32 %v196, 0.0
    %v251 = vmax.f32 %v201, 0.0
    %v252 = vmax.f32 %v206, 0.0
    %v253 = vmax.f32 %v211, 0.0
    %v254 = vmax.f32 %v216, 0.0
    %v255 = vmax.f32 %v221, 0.0
    %v256 = vmax.f32 %v226, 0.0
    %v257 = vmax.f32 %v231, 0.0
    %v258 = vmax.f32 %v236, 0.0
    %v259 = vmax.f32 %v241, 0.0
    %v260 = vld [vmem:[%s3] sm:$0x1]
    %v261 = vld [vmem:[#allocation2] sm:$0x1]
    %263 = vset.pattern.permute.xlu0 0
    %264 = vperm.xlu0 %263, %v261
    %v265 = vpop.permute.xlu0 %264
    %v267 = vlaneseq
    %v268 = vshrl.u32 %v267, 7
    %v269 = vsub.s32 0, %v268
    %v270 = vrot.slane %v265, %v269
    %vm271 = vcmask 31744
    %v273 = vsel %vm271, %v260, 0
    %v276 = vsel %vm271, %v244, 0
    %v279 = vsel %vm271, %v245, 0
    %v282 = vsel %vm271, %v246, 0
    %v285 = vsel %vm271, %v247, 0
    %v288 = vsel %vm271, %v248, 0
    %v291 = vsel %vm271, %v249, 0
    %v294 = vsel %vm271, %v250, 0
    %v297 = vsel %vm271, %v251, 0
    %v300 = vsel %vm271, %v252, 0
    %v303 = vsel %vm271, %v253, 0
    %v306 = vsel %vm271, %v254, 0
    %v309 = vsel %vm271, %v255, 0
    %v312 = vsel %vm271, %v256, 0
    %v315 = vsel %vm271, %v257, 0
    %v318 = vsel %vm271, %v258, 0
    %v321 = vsel %vm271, %v259, 0
    %323 = vmatprep.subr.mxu0 0.0
    %324 = vmatpush1.xpose.msra.mxu0 %v276
    %325 = vmatprep.subr.mxu0 0.0
    %326 = vmatpush1.xpose.msra.mxu0 %v279
    %327 = vmatprep.subr.mxu0 0.0
    %328 = vmatpush1.xpose.msra.mxu0 %v282
    %329 = vmatprep.subr.mxu0 0.0
    %330 = vmatpush1.xpose.msra.mxu0 %v285
    %331 = vmatprep.subr.mxu0 0.0
    %332 = vmatpush1.xpose.msra.mxu0 %v288
    %333 = vmatprep.subr.mxu0 0.0
    %334 = vmatpush1.xpose.msra.mxu0 %v291
    %335 = vmatprep.subr.mxu0 0.0
    %336 = vmatpush1.xpose.msra.mxu0 %v294
    %337 = vmatprep.subr.mxu0 0.0
    %338 = vmatpush1.xpose.msra.mxu0 %v297
    %339 = vmatprep.subr.mxu0 0.0
    %340 = vmatpush1.xpose.msra.mxu0 %v300
    %341 = vmatprep.subr.mxu0 0.0
    %342 = vmatpush1.xpose.msra.mxu0 %v303
    %343 = vmatprep.subr.mxu0 0.0
    %344 = vmatpush1.xpose.msra.mxu0 %v306
    %345 = vmatprep.subr.mxu0 0.0
    %346 = vmatpush1.xpose.msra.mxu0 %v309
    %347 = vmatprep.subr.mxu0 0.0
    %348 = vmatpush1.xpose.msra.mxu0 %v312
    %349 = vmatprep.subr.mxu0 0.0
    %350 = vmatpush1.xpose.msra.mxu0 %v315
    %351 = vmatprep.subr.mxu0 0.0
    %352 = vmatpush1.xpose.msra.mxu0 %v318
    %353 = vmatprep.subr.mxu0 0.0
    %354 = vmatpush1.xpose.msra.mxu0 %v321
    %355 = vmatprep.subr.mxu0 0.0
    %356 = vmatpush1.xpose.msra.mxu0 0.0
    %357 = vmatprep.subr.mxu0 0.0
    %358 = vmatpush1.xpose.msra.mxu0 0.0
    %359 = vmatprep.subr.mxu0 0.0
    %360 = vmatpush1.xpose.msra.mxu0 0.0
    %361 = vmatprep.subr.mxu0 0.0
    %362 = vmatpush1.xpose.msra.mxu0 0.0
    %363 = vmatprep.subr.mxu0 0.0
    %364 = vmatpush1.xpose.msra.mxu0 0.0
    %365 = vmatprep.subr.mxu0 0.0
    %366 = vmatpush1.xpose.msra.mxu0 0.0
    %367 = vmatprep.subr.mxu0 0.0
    %368 = vmatpush1.xpose.msra.mxu0 0.0
    %369 = vmatprep.subr.mxu0 0.0
    %370 = vmatpush1.xpose.msra.mxu0 0.0
    %371 = vmatprep.subr.mxu0 0.0
    %372 = vmatpush1.xpose.msra.mxu0 0.0
    %373 = vmatprep.subr.mxu0 0.0
    %374 = vmatpush1.xpose.msra.mxu0 0.0
    %375 = vmatprep.subr.mxu0 0.0
    %376 = vmatpush1.xpose.msra.mxu0 0.0
    %377 = vmatprep.subr.mxu0 0.0
    %378 = vmatpush1.xpose.msra.mxu0 0.0
    %379 = vmatprep.subr.mxu0 0.0
    %380 = vmatpush1.xpose.msra.mxu0 0.0
    %381 = vmatprep.subr.mxu0 0.0
    %382 = vmatpush1.xpose.msra.mxu0 0.0
    %383 = vmatprep.subr.mxu0 0.0
    %384 = vmatpush1.xpose.msra.mxu0 0.0
    %385 = vmatprep.subr.mxu0 0.0
    %386 = vmatpush1.xpose.msra.mxu0 0.0
    %387 = vmatprep.mubr.f32.mxu0 0.0
    %388 = vmatmul.mubr.f32.gmra.mrb[0].mxu0 %v273
    %v389 = vpop.f32.mrb[0].mxu0
    %v390 = vadd.f32 %v270, %v389
    %v391 = vpop.f32.mrb[0].mxu0
    %392 = vdwg.mxu0
    %393 = vst [vmem:[#allocation3] sm:$0x1] %v390
    // Predicated region
    $region22: #{tpu_custom_call.1} parent=1 // pred_check
      _
    $region23: #{tpu_custom_call.1} parent=1 // pred_check_branch
      %395 = sbr.rel (0) target = $region25
    $region24: #{tpu_custom_call.1} parent=1 // pred_region
      %s397 = ssub.s32 16, 16
      %398 = vsyncadd [#allocation4], %s397
      %s400 = sshll.u32 [#allocation3], 4
      %s401 = int_to_ptr.vmem [resolvable:$true] %s400
      %403 = dma.vmem_to_hbm [thread:$0]  %s401, 16, %s5, [#allocation4]
    $region25: #{tpu_custom_call.1} parent=1 // pred_fallthru
      _
    // Predicated region
    $region26: #{tpu_custom_call.1} parent=1 // pred_check
      _
    $region27: #{tpu_custom_call.1} parent=1 // pred_check_branch
      %405 = sbr.rel (0) target = $region29
    $region28: #{tpu_custom_call.1} parent=1 // pred_region
      %406 = dma.done [#allocation4], 16
    $region29: #{tpu_custom_call.1} parent=1 // pred_fallthru
      _
    %407 = vsyncpa [#allocation4], 1

</llo_original>
